<compile_context>
chip_gen: v7x
topology: tpu7x:2x2x1
jax: 0.10.0
libtpu: 0.0.40
codegen_flags: <defaults>
</compile_context>

<pallas_src>
import functools

import jax
import jax.numpy as jnp
from jax.experimental import pallas as pl
from jax.experimental.pallas import tpu as pltpu


# ----------------------------- Pallas kernel ---------------------------------
def _laplace_nll_kernel(eps, reduction, inv_count,
                        pred_ref, target_ref, out_ref):
    """Fused LaplaceNLLLoss.

    pred_ref:   (..., 2*D) f32  -- loc = [..., :D], scale = [..., D:]
    target_ref: (..., D)   f32
    out_ref:    target shape for reduction='none', (1, 1) for 'mean'/'sum'.
    """
    pred = pred_ref[...]
    target = target_ref[...]
    d = target.shape[-1]

    loc = pred[..., :d]                               # chunk(2, dim=-1)[0]
    scale = jnp.maximum(pred[..., d:], eps)           # chunk(...)[1].clamp_(min=eps)

    inv_scale = pl.reciprocal(scale, approx=True)     # EUP vrcp (free slot)
    nll = jnp.log(2.0 * scale) + jnp.abs(target - loc) * inv_scale

    if reduction == "none":
        out_ref[...] = nll
    else:
        total = jnp.sum(nll)
        if reduction == "mean":
            total = total * inv_count
        out_ref[...] = jnp.full((1, 1), total, dtype=out_ref.dtype)


# ----------------------------- wrapper ----------------------------------------
def laplace_nll_loss(pred, target, *, eps=1e-6, reduction="mean"):
    """pred: (..., 2*D), target: (..., D) -> scalar ('mean'/'sum') or (..., D)."""
    if reduction not in ("mean", "sum", "none"):
        raise ValueError(f"{reduction} is not a valid value for reduction")
    assert pred.shape[:-1] == target.shape[:-1]
    assert pred.shape[-1] == 2 * target.shape[-1]

    pred = pred.astype(jnp.float32)
    target = target.astype(jnp.float32)

    if reduction == "none":
        out_shape = jax.ShapeDtypeStruct(target.shape, jnp.float32)
    else:
        out_shape = jax.ShapeDtypeStruct((1, 1), jnp.float32)

    kernel = functools.partial(_laplace_nll_kernel, float(eps), reduction,
                               1.0 / float(target.size))

    # Whole arrays fit trivially in VMEM -> full-array blocks, no grid.
    vmem = pl.BlockSpec(memory_space=pltpu.MemorySpace.VMEM)
    out = pl.pallas_call(
        kernel,
        out_shape=out_shape,
        in_specs=[vmem, vmem],
        out_specs=vmem,
    )(pred, target)

    if reduction == "none":
        return out
    return out[0, 0]   # 0-d result, matching torch's scalar tensor


# ----------------------------- main -------------------------------------------
if __name__ == "__main__":
    key = jax.random.PRNGKey(0)
    k_loc, k_scale, k_tgt = jax.random.split(key, 3)

    # Small shapes consistent with the module: batch=2, seq=8, hidden(D)=32,
    # so pred has last dim 2*D = 64 (loc ++ scale) and target has last dim 32.
    B, T, D = 2, 8, 32
    loc = jax.random.normal(k_loc, (B, T, D), jnp.float32)
    scale = jax.random.uniform(k_scale, (B, T, D), jnp.float32,
                               minval=0.5, maxval=2.0)   # well-conditioned scales
    pred = jnp.concatenate([loc, scale], axis=-1)        # (B, T, 2*D)
    target = jax.random.normal(k_tgt, (B, T, D), jnp.float32)

    # reduction='mean' (module default)
    out = jax.block_until_ready(laplace_nll_loss(pred, target, reduction="mean"))

    # pure-JAX reference check
    ref_scale = jnp.maximum(scale, 1e-6)
    ref = jnp.mean(jnp.log(2.0 * ref_scale) + jnp.abs(target - loc) / ref_scale)
    assert out.shape == ()
    assert bool(jnp.isfinite(out))
    assert abs(float(out) - float(ref)) <= 1e-3 * max(1.0, abs(float(ref)))

    # exercise the other reduction modes once
    out_none = jax.block_until_ready(laplace_nll_loss(pred, target, reduction="none"))
    assert out_none.shape == target.shape
    assert bool(jnp.all(jnp.isfinite(out_none)))
    out_sum = jax.block_until_ready(laplace_nll_loss(pred, target, reduction="sum"))
    assert bool(jnp.isfinite(out_sum))

    print("KERNEL_OK")
</pallas_src>

<mosaic_0001>
module attributes {stable_mosaic.version = 11 : i64} {
  func.func @_laplace_nll_kernel(%arg0: memref<2x8x64xf32, #tpu.memory_space<vmem>>, %arg1: memref<2x8x32xf32, #tpu.memory_space<vmem>>, %arg2: memref<1x1xf32, #tpu.memory_space<vmem>>) attributes {dimension_semantics = [], scalar_prefetch = 0 : i64, scratch_operands = 0 : i64, tpu.core_type = #tpu.core_type<tc>} {
    %c0 = arith.constant 0 : index
    %c0_0 = arith.constant 0 : index
    %c0_1 = arith.constant 0 : index
    %0 = vector.load %arg0[%c0, %c0_0, %c0_1] : memref<2x8x64xf32, #tpu.memory_space<vmem>>, vector<2x8x64xf32>
    %c0_2 = arith.constant 0 : index
    %c0_3 = arith.constant 0 : index
    %c0_4 = arith.constant 0 : index
    %1 = vector.load %arg1[%c0_2, %c0_3, %c0_4] : memref<2x8x32xf32, #tpu.memory_space<vmem>>, vector<2x8x32xf32>
    %2 = vector.extract_strided_slice %0 {offsets = [0, 0, 0], sizes = [2, 8, 32], strides = [1, 1, 1]} : vector<2x8x64xf32> to vector<2x8x32xf32>
    %3 = vector.extract_strided_slice %0 {offsets = [0, 0, 32], sizes = [2, 8, 32], strides = [1, 1, 1]} : vector<2x8x64xf32> to vector<2x8x32xf32>
    %cst = arith.constant 9.99999997E-7 : f32
    %4 = vector.broadcast %cst : f32 to vector<2x8x32xf32>
    %5 = arith.maximumf %3, %4 : vector<2x8x32xf32>
    %6 = tpu.reciprocal %5 {approx = true} : vector<2x8x32xf32> -> vector<2x8x32xf32>
    %cst_5 = arith.constant 2.000000e+00 : f32
    %7 = vector.broadcast %cst_5 : f32 to vector<2x8x32xf32>
    %8 = arith.mulf %7, %5 : vector<2x8x32xf32>
    %9 = math.log %8 : vector<2x8x32xf32>
    %10 = arith.subf %1, %2 : vector<2x8x32xf32>
    %11 = math.absf %10 : vector<2x8x32xf32>
    %12 = arith.mulf %11, %6 : vector<2x8x32xf32>
    %13 = arith.addf %9, %12 : vector<2x8x32xf32>
    %14 = vector.shape_cast %13 : vector<2x8x32xf32> to vector<1x2x8x32xf32>
    %cst_6 = arith.constant dense<0.000000e+00> : vector<1xf32>
    %15 = vector.multi_reduction <add>, %14, %cst_6 [1, 2, 3] : vector<1x2x8x32xf32> to vector<1xf32>
    %16 = vector.shape_cast %15 : vector<1xf32> to vector<1x1x1x1xf32>
    %17 = vector.extract %16[0, 0, 0, 0] : f32 from vector<1x1x1x1xf32>
    %cst_7 = arith.constant 0.001953125 : f32
    %18 = arith.mulf %17, %cst_7 : f32
    %19 = vector.broadcast %18 : f32 to vector<1x1xf32>
    %c0_8 = arith.constant 0 : index
    %c0_9 = arith.constant 0 : index
    %20 = vector.load %arg2[%c0_8, %c0_9] : memref<1x1xf32, #tpu.memory_space<vmem>>, vector<1x1xf32>
    tpu.vector_store %arg2[%c0_8, %c0_9], %19 {strides = array<i32>} : memref<1x1xf32, #tpu.memory_space<vmem>>, vector<1x1xf32>,
    return
  }
}

</mosaic_0001>

<llo_original>
// kernel: tpu_custom_call.1
$region0: #{tpu_custom_call.1}
  #allocation0 [shape = 'u32[]', space=smem, size = 0x4, offset = 0x4, fixed_abs, tag = 'smem constant byte address 0x4 - core index']
  #allocation1 [shape = 'u32[144,128]{1,0:T(1,128)}', space=vmem, size = 0x12000, scoped, tag = 'internal scratch']
  %s0 = inlined_call_operand.hbm [shape: f32[2,8,64], index: 0, kind: input, shape index: {}]
  %s1 = inlined_call_operand.hbm [shape: f32[2,8,32], index: 1, kind: input, shape index: {}]
  %s2 = inlined_call_operand.hbm [shape: f32[1,1], index: 2, kind: output, shape index: {}]
  %s3 = sld [smem:[#allocation0]]
  $region26: #{tpu_custom_call.1} parent=0
    _
  %s5 = ssub.s32 1, %s3
  %s6 = scalar_select 0, %s5, %s3
  $region1: #{tpu_custom_call.1} parent=0
    #allocation2 [shape = 'u8[8192]{0}', space=vmem, size = 0x2000, scoped, tag = 'input window, operand 0, single buffered']
    #allocation3 [shape = 's32[1]{0}', space=sflag, size = 0x4, scoped, tag = 'scoped memory for tpu_custom_call.1']
    #allocation4 [shape = 's32[1]{0}', space=sflag, size = 0x4, scoped, tag = 'scoped memory for tpu_custom_call.1']
    #allocation5 [shape = 'u8[8192]{0}', space=vmem, size = 0x2000, scoped, tag = 'input window, operand 1, single buffered']
    #allocation6 [shape = 's32[1]{0}', space=sflag, size = 0x4, scoped, tag = 'scoped memory for tpu_custom_call.1']
    #allocation7 [shape = 'u8[512]{0}', space=vmem, size = 0x400, scoped, tag = 'output window, operand 0, single buffered']
    %7 = vsyncpa [#allocation3], 0
    %8 = vsyncpa [#allocation6], 0
    %9 = vsyncpa [#allocation4], 0
    // Predicated region
    $region2: #{tpu_custom_call.1} parent=1 // pred_check
      _
    $region3: #{tpu_custom_call.1} parent=1 // pred_check_branch
      %11 = sbr.rel (0) target = $region5
    $region4: #{tpu_custom_call.1} parent=1 // pred_region
      %s13 = ssub.s32 256, 256
      %14 = vsyncadd [#allocation3], %s13
      %s15 = sshll.u32 [#allocation2], 4
      %s16 = int_to_ptr.vmem [resolvable:$true] %s15
      %21 = dma.hbm_to_vmem [thread:$0]  %s0, 256, %s16, [#allocation3], 128, 128, 8
    $region5: #{tpu_custom_call.1} parent=1 // pred_fallthru
      _
    // Predicated region
    $region6: #{tpu_custom_call.1} parent=1 // pred_check
      _
    $region7: #{tpu_custom_call.1} parent=1 // pred_check_branch
      %23 = sbr.rel (0) target = $region9
    $region8: #{tpu_custom_call.1} parent=1 // pred_region
      %s25 = ssub.s32 256, 256
      %26 = vsyncadd [#allocation6], %s25
      %s27 = sshll.u32 [#allocation5], 4
      %s28 = int_to_ptr.vmem [resolvable:$true] %s27
      %33 = dma.hbm_to_vmem [thread:$0]  %s1, 256, %s28, [#allocation6], 128, 128, 8
    $region9: #{tpu_custom_call.1} parent=1 // pred_fallthru
      _
    // Predicated region
    $region10: #{tpu_custom_call.1} parent=1 // pred_check
      _
    $region11: #{tpu_custom_call.1} parent=1 // pred_check_branch
      %35 = sbr.rel (0) target = $region13
    $region12: #{tpu_custom_call.1} parent=1 // pred_region
      %36 = dma.done [#allocation3], 256
    $region13: #{tpu_custom_call.1} parent=1 // pred_fallthru
      _
    // Predicated region
    $region14: #{tpu_custom_call.1} parent=1 // pred_check
      _
    $region15: #{tpu_custom_call.1} parent=1 // pred_check_branch
      %38 = sbr.rel (0) target = $region17
    $region16: #{tpu_custom_call.1} parent=1 // pred_region
      %39 = dma.done [#allocation6], 256
    $region17: #{tpu_custom_call.1} parent=1 // pred_fallthru
      _
    %v40 = vld [vmem:[#allocation2] sm:$0xff]
    %v41 = vld [vmem:[#allocation2 + $0x8] sm:$0xff]
    %v42 = vld [vmem:[#allocation5] sm:$0xff]
    %v43 = vld [vmem:[#allocation5 + $0x8] sm:$0xff]
    %v44 = vmax.f32 %v40, 1e-06
    %v45 = vmax.f32 %v41, 1e-06
    %v46 = vrcp.pop %v44
    %v47 = vrcp.pop %v45
    %v48 = vmul.f32 %v44, 2.0
    %v49 = vmul.f32 %v45, 2.0
    %v50 = vlog2.pop %v48
    %v51 = vmul.f32 %v50, 0.6931472
    %v52 = vlog2.pop %v49
    %v53 = vmul.f32 %v52, 0.6931472
    %v54 = vsub.f32 %v42, %v40
    %v55 = vsub.f32 %v43, %v41
    %v56 = vand.u32 2147483647, %v54
    %v57 = vand.u32 2147483647, %v55
    %60 = vrot.lane.b32.xlu0 %v46, 96
    %v61 = vpop.permute.xlu0 %60
    %62 = vrot.lane.b32.xlu0 %v47, 96
    %v63 = vpop.permute.xlu0 %62
    %v66 = vmul.f32 %v56, %v61
    %v67 = vmul.f32 %v57, %v63
    %70 = vrot.lane.b32.xlu0 %v66, 32
    %v71 = vpop.permute.xlu0 %70
    %72 = vrot.lane.b32.xlu0 %v67, 32
    %v73 = vpop.permute.xlu0 %72
    %v76 = vadd.f32 %v51, %v71
    %v77 = vadd.f32 %v53, %v73
    %80 = vrot.lane.b32.xlu0 %v76, 96
    %v81 = vpop.permute.xlu0 %80
    %82 = vrot.lane.b32.xlu0 %v77, 96
    %v83 = vpop.permute.xlu0 %82
    %vm86 = vcmask 261120
    %v87 = vsel %vm86, %v81, 0.0
    %v88 = vsel %vm86, %v83, 0.0
    %v89 = vadd.f32 %v87, %v88
    %90 = vadd.xlane.f32.xlu0 %v89
    %v91 = vpop.xlane.xlu0 %90
    %v92 = vrot.slane %v91, 4
    %v93 = vadd.f32 %v91, %v92
    %v94 = vrot.slane %v93, 2
    %v95 = vadd.f32 %v93, %v94
    %v96 = vrot.slane %v95, 1
    %v97 = vadd.f32 %v95, %v96
    %s98 = vtos %v97
    %s99 = smul.f32 %s98, 0.001953125
    %v100 = vstv %s99
    %vm101 = vcmask 0
    %102 = vst.msk [vmem:[#allocation7] sm:$0x1] %vm101, %v100
    // Predicated region
    $region18: #{tpu_custom_call.1} parent=1 // pred_check
      _
    $region19: #{tpu_custom_call.1} parent=1 // pred_check_branch
      %104 = sbr.rel (0) target = $region21
    $region20: #{tpu_custom_call.1} parent=1 // pred_region
      %s106 = ssub.s32 16, 16
      %107 = vsyncadd [#allocation4], %s106
      %s109 = sshll.u32 [#allocation7], 4
      %s110 = int_to_ptr.vmem [resolvable:$true] %s109
      %112 = dma.vmem_to_hbm [thread:$0]  %s110, 16, %s2, [#allocation4]
    $region21: #{tpu_custom_call.1} parent=1 // pred_fallthru
      _
    // Predicated region
    $region22: #{tpu_custom_call.1} parent=1 // pred_check
      _
    $region23: #{tpu_custom_call.1} parent=1 // pred_check_branch
      %114 = sbr.rel (0) target = $region25
    $region24: #{tpu_custom_call.1} parent=1 // pred_region
      %115 = dma.done [#allocation4], 16
    $region25: #{tpu_custom_call.1} parent=1 // pred_fallthru
      _
    %116 = vsyncpa [#allocation3], 1
    %117 = vsyncpa [#allocation6], 1
    %118 = vsyncpa [#allocation4], 1

</llo_original>
